<compile_context>
chip_gen: v7x
topology: tpu7x:2x2x1
jax: 0.10.0
libtpu: 0.0.40
codegen_flags: <defaults>
</compile_context>

<pallas_src>
import functools

import jax
import jax.numpy as jnp
from jax.experimental import pallas as pl
from jax.experimental.pallas import tpu as pltpu


def _clloss_kernel(embed_ref, labels_ref, loss_ref, *, inv_t, batch_size,
                   norm_eps, pd_eps, c_eps):
    x = embed_ref[...].astype(jnp.float32)      # (B, H) embeddings
    lab = labels_ref[...].astype(jnp.float32)   # (B, L) labels.float()

    # F.normalize(embed, dim=-1): x / max(||x||_2, 1e-12)
    nrm = jnp.sqrt(jnp.sum(x * x, axis=-1, keepdims=True))           # (B, 1)
    xn = x / jnp.maximum(nrm, norm_eps)                               # (B, H)

    # Only i == 0 contributes (early return inside the PyTorch i-loop).
    x0 = xn[0:1, :]                                                   # (1, H)
    l0 = lab[0:1, :]                                                  # (1, L)

    # Pairwise L2 distance i=0 vs all j (PairwiseDistance adds eps elementwise).
    diff = x0 - xn + pd_eps                                           # (B, H)
    dist = jnp.sqrt(jnp.sum(diff * diff, axis=-1, keepdims=True))     # (B, 1)
    d_over_t = dist * inv_t                                           # (B, 1)

    # Label co-occurrence labels[0] . labels[j], vectorized over j.
    ldot = jnp.sum(lab * l0, axis=-1, keepdims=True)                  # (B, 1)

    # Single mask for the j == i (== 0) term, applied to ldot and sim only.
    j_idx = jax.lax.broadcasted_iota(jnp.int32, (batch_size, 1), 0)
    not_self = j_idx != 0                                             # (B, 1)
    ldot_m = jnp.where(not_self, ldot, 0.0)                           # (B, 1)
    sim_m = jnp.where(not_self, jnp.exp(-d_over_t), 0.0)              # (B, 1)

    Ci = c_eps + jnp.sum(ldot_m, axis=0, keepdims=True)               # (1, 1)
    Ei = c_eps + jnp.sum(sim_m, axis=0, keepdims=True)                # (1, 1)

    recip_Ci = pl.reciprocal(Ci, approx=True)                         # (1, 1) EUP
    log_Ei = jnp.log(Ei)                                              # (1, 1) single log

    # Eij = -Cij * log(exp(-d/t)/Ei) = (ldot/Ci) * (d/t + log Ei); j==0 term is 0 (ldot_m).
    Eij = (ldot_m * recip_Ci) * (d_over_t + log_Ei)                   # (B, 1)

    # loss = L_0 / batch_size, written as a scalar straight to SMEM.
    loss_ref[0, 0] = jnp.sum(Eij) * (1.0 / float(batch_size))


def clloss_forward(embed, labels, *, t=0.1):
    """Pallas implementation of CLloss.forward(embed, labels) -> scalar loss."""
    B, H = embed.shape
    kernel = functools.partial(_clloss_kernel, inv_t=1.0 / t, batch_size=B,
                               norm_eps=1e-12, pd_eps=1e-6, c_eps=1e-12)
    loss = pl.pallas_call(
        kernel,
        out_shape=jax.ShapeDtypeStruct((1, 1), jnp.float32),
        # No grid: single invocation, whole (tiny) arrays resident in VMEM.
        in_specs=[
            pl.BlockSpec(memory_space=pltpu.MemorySpace.VMEM),   # embeddings
            pl.BlockSpec(memory_space=pltpu.MemorySpace.VMEM),   # labels
        ],
        # Scalar output via SMEM: no padded vreg store, no output DMA.
        out_specs=pl.BlockSpec(memory_space=pltpu.MemorySpace.SMEM),
    )(embed, labels)
    return loss[0, 0]


def _reference(embed, labels, t=0.1):
    """Pure-JAX mirror of the PyTorch CLloss.forward (loop-for-loop faithful)."""
    labels = labels.astype(jnp.float32)
    nrm = jnp.sqrt(jnp.sum(embed * embed, axis=-1, keepdims=True))
    xn = embed / jnp.maximum(nrm, 1e-12)
    B = embed.shape[0]
    loss = jnp.float32(0.0)
    for i in range(B):
        Ci = 1e-12
        Ei = 1e-12
        Li = 0.0
        for j in range(B):
            if i == j:
                continue
            Ci = Ci + jnp.dot(labels[i], labels[j])
            d = jnp.sqrt(jnp.sum((xn[i] - xn[j] + 1e-6) ** 2))
            Ei = Ei + jnp.exp(-d / t)
        for j in range(B):
            if i == j:
                continue
            Cij = jnp.dot(labels[i], labels[j]) / Ci
            d = jnp.sqrt(jnp.sum((xn[i] - xn[j] + 1e-6) ** 2))
            Eij = -Cij * jnp.log(jnp.exp(-d / t) / Ei)
            Li = Li + Eij
        loss = loss + Li / B
        return loss  # NOTE: early return inside the i-loop, exactly as in the PyTorch code


if __name__ == "__main__":
    B, H, L = 8, 32, 4   # batch, hidden (embedding dim), number of labels
    key = jax.random.PRNGKey(0)
    k1, k2 = jax.random.split(key)

    embed = jax.random.normal(k1, (B, H), jnp.float32)                    # model embeddings
    labels = (jax.random.uniform(k2, (B, L)) < 0.5).astype(jnp.float32)   # multi-hot labels

    loss = clloss_forward(embed, labels, t=0.1)
    jax.block_until_ready(loss)

    loss_ref = _reference(embed, labels, t=0.1)
    assert loss.shape == ()
    assert jnp.isfinite(loss)
    # Tolerance: pl.reciprocal(..., approx=True) carries ~2^-12 relative error on 1/Ci,
    # which scales the whole loss; everything else agrees to ~1e-6.
    assert jnp.allclose(loss, loss_ref, atol=2e-4, rtol=2e-3), (loss, loss_ref)

    print("KERNEL_OK")
</pallas_src>

<mosaic_0001>
module attributes {stable_mosaic.version = 11 : i64} {
  func.func @_clloss_kernel(%arg0: memref<8x32xf32, #tpu.memory_space<vmem>>, %arg1: memref<8x4xf32, #tpu.memory_space<vmem>>, %arg2: memref<1x1xf32, #tpu.memory_space<smem>>) attributes {dimension_semantics = [], scalar_prefetch = 0 : i64, scratch_operands = 0 : i64, tpu.core_type = #tpu.core_type<tc>} {
    %c0 = arith.constant 0 : index
    %c0_0 = arith.constant 0 : index
    %0 = vector.load %arg0[%c0, %c0_0] : memref<8x32xf32, #tpu.memory_space<vmem>>, vector<8x32xf32>
    %c0_1 = arith.constant 0 : index
    %c0_2 = arith.constant 0 : index
    %1 = vector.load %arg1[%c0_1, %c0_2] : memref<8x4xf32, #tpu.memory_space<vmem>>, vector<8x4xf32>
    %2 = arith.mulf %0, %0 : vector<8x32xf32>
    %cst = arith.constant dense<0.000000e+00> : vector<8xf32>
    %3 = vector.multi_reduction <add>, %2, %cst [1] : vector<8x32xf32> to vector<8xf32>
    %4 = vector.shape_cast %3 : vector<8xf32> to vector<8x1xf32>
    %5 = math.sqrt %4 : vector<8x1xf32>
    %cst_3 = arith.constant 9.99999996E-13 : f32
    %6 = vector.broadcast %cst_3 : f32 to vector<8x1xf32>
    %7 = arith.maximumf %5, %6 : vector<8x1xf32>
    %8 = vector.broadcast %7 : vector<8x1xf32> to vector<8x32xf32>
    %9 = arith.divf %0, %8 : vector<8x32xf32>
    %10 = vector.extract_strided_slice %9 {offsets = [0, 0], sizes = [1, 32], strides = [1, 1]} : vector<8x32xf32> to vector<1x32xf32>
    %11 = vector.extract_strided_slice %1 {offsets = [0, 0], sizes = [1, 4], strides = [1, 1]} : vector<8x4xf32> to vector<1x4xf32>
    %12 = vector.broadcast %10 : vector<1x32xf32> to vector<8x32xf32>
    %13 = arith.subf %12, %9 : vector<8x32xf32>
    %cst_4 = arith.constant 9.99999997E-7 : f32
    %14 = vector.broadcast %cst_4 : f32 to vector<8x32xf32>
    %15 = arith.addf %13, %14 : vector<8x32xf32>
    %16 = arith.mulf %15, %15 : vector<8x32xf32>
    %cst_5 = arith.constant dense<0.000000e+00> : vector<8xf32>
    %17 = vector.multi_reduction <add>, %16, %cst_5 [1] : vector<8x32xf32> to vector<8xf32>
    %18 = vector.shape_cast %17 : vector<8xf32> to vector<8x1xf32>
    %19 = math.sqrt %18 : vector<8x1xf32>
    %cst_6 = arith.constant 1.000000e+01 : f32
    %20 = vector.broadcast %cst_6 : f32 to vector<8x1xf32>
    %21 = arith.mulf %19, %20 : vector<8x1xf32>
    %22 = vector.broadcast %11 : vector<1x4xf32> to vector<8x4xf32>
    %23 = arith.mulf %1, %22 : vector<8x4xf32>
    %cst_7 = arith.constant dense<0.000000e+00> : vector<8xf32>
    %24 = vector.multi_reduction <add>, %23, %cst_7 [1] : vector<8x4xf32> to vector<8xf32>
    %25 = vector.shape_cast %24 : vector<8xf32> to vector<8x1xf32>
    %26 = tpu.iota {dimensions = array<i32: 0>} : vector<8x1xi32>
    %c0_i32 = arith.constant 0 : i32
    %27 = vector.broadcast %c0_i32 : i32 to vector<8x1xi32>
    %28 = arith.cmpi ne, %26, %27 : vector<8x1xi32>
    %cst_8 = arith.constant 0.000000e+00 : f32
    %29 = vector.broadcast %cst_8 : f32 to vector<8x1xf32>
    %30 = arith.select %28, %25, %29 : vector<8x1xi1>, vector<8x1xf32>
    %cst_9 = arith.constant 0.000000e+00 : f32
    %31 = vector.broadcast %cst_9 : f32 to vector<8x1xf32>
    %32 = arith.subf %31, %21 : vector<8x1xf32>
    %33 = math.exp %32 : vector<8x1xf32>
    %cst_10 = arith.constant 0.000000e+00 : f32
    %34 = vector.broadcast %cst_10 : f32 to vector<8x1xf32>
    %35 = arith.select %28, %33, %34 : vector<8x1xi1>, vector<8x1xf32>
    %cst_11 = arith.constant dense<0.000000e+00> : vector<1xf32>
    %36 = vector.multi_reduction <add>, %30, %cst_11 [0] : vector<8x1xf32> to vector<1xf32>
    %37 = vector.shape_cast %36 : vector<1xf32> to vector<1x1xf32>
    %cst_12 = arith.constant 9.99999996E-13 : f32
    %38 = vector.broadcast %cst_12 : f32 to vector<1x1xf32>
    %39 = arith.addf %38, %37 : vector<1x1xf32>
    %cst_13 = arith.constant dense<0.000000e+00> : vector<1xf32>
    %40 = vector.multi_reduction <add>, %35, %cst_13 [0] : vector<8x1xf32> to vector<1xf32>
    %41 = vector.shape_cast %40 : vector<1xf32> to vector<1x1xf32>
    %cst_14 = arith.constant 9.99999996E-13 : f32
    %42 = vector.broadcast %cst_14 : f32 to vector<1x1xf32>
    %43 = arith.addf %42, %41 : vector<1x1xf32>
    %44 = tpu.reciprocal %39 {approx = true} : vector<1x1xf32> -> vector<1x1xf32>
    %45 = math.log %43 : vector<1x1xf32>
    %46 = vector.broadcast %44 : vector<1x1xf32> to vector<8x1xf32>
    %47 = arith.mulf %30, %46 : vector<8x1xf32>
    %48 = vector.broadcast %45 : vector<1x1xf32> to vector<8x1xf32>
    %49 = arith.addf %21, %48 : vector<8x1xf32>
    %50 = arith.mulf %47, %49 : vector<8x1xf32>
    %51 = vector.shape_cast %50 : vector<8x1xf32> to vector<1x8x1xf32>
    %cst_15 = arith.constant dense<0.000000e+00> : vector<1xf32>
    %52 = vector.multi_reduction <add>, %51, %cst_15 [1, 2] : vector<1x8x1xf32> to vector<1xf32>
    %53 = vector.shape_cast %52 : vector<1xf32> to vector<1x1x1xf32>
    %54 = vector.extract %53[0, 0, 0] : f32 from vector<1x1x1xf32>
    %cst_16 = arith.constant 1.250000e-01 : f32
    %55 = arith.mulf %54, %cst_16 : f32
    %c0_17 = arith.constant 0 : index
    %c0_18 = arith.constant 0 : index
    %56 = memref.load %arg2[%c0_17, %c0_18] : memref<1x1xf32, #tpu.memory_space<smem>>
    memref.store %55, %arg2[%c0_17, %c0_18] : memref<1x1xf32, #tpu.memory_space<smem>>
    return
  }
}

</mosaic_0001>

<llo_original>
// kernel: tpu_custom_call.1
$region0: #{tpu_custom_call.1}
  #allocation0 [shape = 'u32[]', space=smem, size = 0x4, offset = 0x4, fixed_abs, tag = 'smem constant byte address 0x4 - core index']
  #allocation1 [shape = 'u32[144,128]{1,0:T(1,128)}', space=vmem, size = 0x12000, scoped, tag = 'internal scratch']
  %s0 = inlined_call_operand.vmem [shape: f32[8,32], index: 0, kind: input, shape index: {}]
  %s1 = inlined_call_operand.vmem [shape: f32[8,4], index: 1, kind: input, shape index: {}]
  %s2 = inlined_call_operand.hbm [shape: f32[1,1], index: 2, kind: output, shape index: {}]
  %s3 = sld [smem:[#allocation0]]
  $region18: #{tpu_custom_call.1} parent=0
    _
  %s5 = ssub.s32 1, %s3
  %s6 = scalar_select 0, %s5, %s3
  $region1: #{tpu_custom_call.1} parent=0
    #allocation2 [shape = 'u8[512]{0}', space=smem, size = 0x200, scoped, tag = 'output window, operand 0, single buffered']
    #allocation3 [shape = 's32[1]{0}', space=sflag, size = 0x4, scoped, tag = 'scoped memory for tpu_custom_call.1']
    %7 = vsyncpa [#allocation3], 0
    // Predicated region
    $region2: #{tpu_custom_call.1} parent=1 // pred_check
      _
    $region3: #{tpu_custom_call.1} parent=1 // pred_check_branch
      %9 = sbr.rel (0) target = $region5
    $region4: #{tpu_custom_call.1} parent=1 // pred_region
      _
    $region5: #{tpu_custom_call.1} parent=1 // pred_fallthru
      _
    // Predicated region
    $region6: #{tpu_custom_call.1} parent=1 // pred_check
      _
    $region7: #{tpu_custom_call.1} parent=1 // pred_check_branch
      %11 = sbr.rel (0) target = $region9
    $region8: #{tpu_custom_call.1} parent=1 // pred_region
      _
    $region9: #{tpu_custom_call.1} parent=1 // pred_fallthru
      _
    %v12 = vld [vmem:[%s0] sm:$0xff]
    %v13 = vld [vmem:[%s1] sm:$0xff]
    %v14 = vmul.f32 %v12, %v12
    %vm15 = vcmask 261120
    %v16 = vsel %vm15, %v14, 0.0
    %17 = vadd.xlane.f32.xlu0 %v16
    %v18 = vpop.xlane.xlu0 %17
    %v19 = vrsqrt.pop %v18
    %v20 = vmul.f32 %v18, %v19
    %vm21 = vcmp.eq.f32.partialorder %v18, inf
    %v22 = vsel %vm21, %v18, %v20
    %vm23 = vcmp.eq.f32.partialorder %v18, 0.0
    %v24 = vand.u32 %v18, 2147483648
    %v25 = vsel %vm23, %v24, %v22
    %v26 = vmax.f32 %v25, 1e-12
    %v27 = vrcp.pop %v26
    %v28 = vmul.f32 %v12, %v27
    %v29 = vlaneseq
    %v30 = vshrl.u32 %v29, 7
    %v31 = vsub.s32 0, %v30
    %v32 = vrot.slane %v28, %v31
    %v33 = vsub.f32 %v32, %v28
    %v34 = vadd.f32 %v33, 1e-06
    %v35 = vmul.f32 %v34, %v34
    %v36 = vsel %vm15, %v35, 0.0
    %37 = vadd.xlane.f32.xlu0 %v36
    %v38 = vpop.xlane.xlu0 %37
    %v39 = vrsqrt.pop %v38
    %v40 = vmul.f32 %v38, %v39
    %vm41 = vcmp.eq.f32.partialorder %v38, inf
    %v42 = vsel %vm41, %v38, %v40
    %vm43 = vcmp.eq.f32.partialorder %v38, 0.0
    %v44 = vand.u32 %v38, 2147483648
    %v45 = vsel %vm43, %v44, %v42
    %v46 = vmul.f32 %v45, 10.0
    %v47 = vlaneseq
    %v48 = vshrl.u32 %v47, 7
    %v49 = vsub.s32 0, %v48
    %v50 = vrot.slane %v13, %v49
    %v51 = vmul.f32 %v13, %v50
    %vm52 = vcmask 31744
    %v53 = vsel %vm52, %v51, 0.0
    %54 = vadd.xlane.f32.xlu0 %v53
    %v55 = vpop.xlane.xlu0 %54
    %v56 = vlaneseq
    %v57 = vshrl.u32 %v56, 7
    %vm58 = vcmp.ne.s32.totalorder %v57, 0
    %v59 = vsel %vm58, %v55, 0.0
    %v60 = vsub.f32 0.0, %v46
    %v61 = vmul.f32 %v60, 1.442695
    %v62 = vpow.pop %v61
    %v63 = vsel %vm58, %v62, 0.0
    %v64 = vrot.slane %v59, 4
    %v65 = vadd.f32 %v59, %v64
    %v66 = vrot.slane %v65, 2
    %v67 = vadd.f32 %v65, %v66
    %v68 = vrot.slane %v67, 1
    %v69 = vadd.f32 %v67, %v68
    %v70 = vadd.f32 %v69, 1e-12
    %v71 = vrot.slane %v63, 4
    %v72 = vadd.f32 %v63, %v71
    %v73 = vrot.slane %v72, 2
    %v74 = vadd.f32 %v72, %v73
    %v75 = vrot.slane %v74, 1
    %v76 = vadd.f32 %v74, %v75
    %v77 = vadd.f32 %v76, 1e-12
    %v78 = vrcp.pop %v70
    %v79 = vlog2.pop %v77
    %v80 = vmul.f32 %v79, 0.6931472
    %v81 = vmul.f32 %v59, %v78
    %v82 = vadd.f32 %v46, %v80
    %v83 = vmul.f32 %v81, %v82
    %vm84 = vcmask 7168
    %v85 = vsel %vm84, %v83, 0.0
    %86 = vadd.xlane.f32.xlu0 %v85
    %v87 = vpop.xlane.xlu0 %86
    %v88 = vrot.slane %v87, 4
    %v89 = vadd.f32 %v87, %v88
    %v90 = vrot.slane %v89, 2
    %v91 = vadd.f32 %v89, %v90
    %v92 = vrot.slane %v91, 1
    %v93 = vadd.f32 %v91, %v92
    %s94 = vtos %v93
    %s95 = smul.f32 %s94, 0.125
    %s96 = scalar_lea.smem [#allocation2], 0
    %97 = sst [smem:[%s96]] %s95
    // Predicated region
    $region10: #{tpu_custom_call.1} parent=1 // pred_check
      _
    $region11: #{tpu_custom_call.1} parent=1 // pred_check_branch
      %99 = sbr.rel (0) target = $region13
    $region12: #{tpu_custom_call.1} parent=1 // pred_region
      %s101 = ssub.s32 16, 16
      %102 = vsyncadd [#allocation3], %s101
      %105 = dma.smem_to_hbm [#allocation2], 16, %s2, [#allocation3]
    $region13: #{tpu_custom_call.1} parent=1 // pred_fallthru
      _
    // Predicated region
    $region14: #{tpu_custom_call.1} parent=1 // pred_check
      _
    $region15: #{tpu_custom_call.1} parent=1 // pred_check_branch
      %107 = sbr.rel (0) target = $region17
    $region16: #{tpu_custom_call.1} parent=1 // pred_region
      %108 = dma.done [#allocation3], 16
    $region17: #{tpu_custom_call.1} parent=1 // pred_fallthru
      _
    %109 = sfence
    %110 = vsyncpa [#allocation3], 1

</llo_original>
